<compile_context>
chip_gen: v7x
topology: tpu7x:2x2x1
jax: 0.10.0
libtpu: 0.0.40
codegen_flags: <defaults>
</compile_context>

<pallas_src>
import math

import jax
import jax.numpy as jnp
from jax.experimental import pallas as pl
from jax.experimental.pallas import tpu as pltpu


def _copy_kernel(x_ref, o_ref):
    # The reshape itself is metadata; the kernel's only job is the tile copy.
    o_ref[...] = x_ref[...]


def _min_sublane(dtype) -> int:
    """Minimum legal sublane multiple for the packed dtype."""
    itemsize = jnp.dtype(dtype).itemsize
    if itemsize >= 4:
        return 8
    if itemsize == 2:
        return 16
    return 32


_TARGET_TILE_BYTES = 2 * 1024 * 1024   # ~2 MiB blocks: amortizes ~0.35 us/step
_VMEM_LIMIT_BYTES = 32 * 1024 * 1024   # 4x tile (in+out, 2-deep) = 8 MiB << limit


def _pick_lane(total: int) -> int:
    """Widest lane dim (multiple of 128, <= 4096) that divides `total`."""
    for k in (32, 16, 8, 4, 2, 1):
        cand = 128 * k
        if total % cand == 0:
            return cand
    return 0  # not lane-aligned


def _pallas_copy_2d(flat):
    """Tiled VMEM copy of a (rows, lane) slab; lane is a multiple of 128."""
    rows, lane = flat.shape
    dtype = flat.dtype
    itemsize = jnp.dtype(dtype).itemsize
    min_sub = _min_sublane(dtype)

    # Row-tile sized for ~2 MiB blocks, rounded to the dtype's sublane multiple.
    tr = _TARGET_TILE_BYTES // (lane * itemsize)
    tr = (tr // min_sub) * min_sub
    tr = max(tr, min_sub)
    if tr >= rows:
        tr = rows  # full-extent block along rows is always legal

    grid = (pl.cdiv(rows, tr),)

    return pl.pallas_call(
        _copy_kernel,
        out_shape=jax.ShapeDtypeStruct((rows, lane), dtype),
        grid_spec=pltpu.PrefetchScalarGridSpec(
            num_scalar_prefetch=0,
            grid=grid,
            in_specs=[pl.BlockSpec((tr, lane), lambda i: (i, 0))],
            out_specs=pl.BlockSpec((tr, lane), lambda i: (i, 0)),
        ),
        compiler_params=pltpu.CompilerParams(
            dimension_semantics=("parallel",),
            vmem_limit_bytes=_VMEM_LIMIT_BYTES,
        ),
        # Same shape/dtype in and out: let the output reuse the input buffer.
        input_output_aliases={0: 0},
    )(flat)


def pallas_reshape(x, shape, *, force_copy=False):
    """Equivalent of torch `x.view(-1, *shape)`.

    Default: pure-metadata reshape (no kernel, no HBM traffic).
    force_copy=True: materialize via a lane-dense Pallas tiled copy.
    """
    shape = tuple(int(s) for s in shape)
    total = math.prod(x.shape)
    inner = math.prod(shape)
    assert inner > 0 and total % inner == 0, (
        "total size must be divisible by prod(shape)")
    out_shape = (total // inner,) + shape

    if not force_copy:
        # Contiguous row-major reshape == .view(): free metadata op.
        return jnp.reshape(x, out_shape)

    lane = _pick_lane(total)
    if lane == 0:
        # Not 128-lane aligned: a padded copy would only add traffic; the
        # metadata reshape is strictly better (and bit-identical).
        return jnp.reshape(x, out_shape)

    flat = jnp.reshape(x, (total // lane, lane))
    out_flat = _pallas_copy_2d(flat)
    return jnp.reshape(out_flat, out_shape)


class ReshapePallas:
    """Mirror of the PyTorch Reshape module (no parameters)."""

    def __init__(self, shape, *, force_copy=False):
        self.shape = tuple(shape)
        self.force_copy = force_copy

    def __call__(self, x):
        return pallas_reshape(x, self.shape, force_copy=self.force_copy)


if __name__ == "__main__":
    key = jax.random.PRNGKey(0)
    # Input analogous to a NCHW conv activation: (B=2, C=4, H=16, W=16).
    x = jax.random.normal(key, (2, 4, 16, 16), dtype=jnp.float32)

    target = (8, 128)                       # Reshape((8, 128)) -> (-1, 8, 128)
    ref = x.reshape((-1,) + target)
    # Derive every input we need from `x` BEFORE any forced-copy call, since
    # the forced-copy path donates (aliases) the input HBM buffer.
    xb = x.astype(jnp.bfloat16)
    ref_b = xb.reshape((-1,) + target)

    # 1) Default path: metadata-only reshape (the recommended fast path).
    mod = ReshapePallas(target)
    out_meta = jax.block_until_ready(mod(x))
    assert out_meta.shape == ref.shape, (out_meta.shape, ref.shape)
    assert jnp.array_equal(out_meta, ref), "metadata reshape mismatch"

    # 2) Forced-copy path: runs the Pallas tiled-copy kernel once.
    mod_copy = ReshapePallas(target, force_copy=True)
    out_copy = jax.block_until_ready(mod_copy(x))
    assert out_copy.shape == ref.shape, (out_copy.shape, ref.shape)
    assert jnp.array_equal(out_copy, ref), "pallas copy reshape mismatch"

    # 3) bf16 input exercises the dtype-aware sublane tiling path.
    out_b = jax.block_until_ready(pallas_reshape(xb, target, force_copy=True))
    assert out_b.shape == ref_b.shape, (out_b.shape, ref_b.shape)
    assert jnp.array_equal(out_b, ref_b), "bf16 mismatch"

    print("KERNEL_OK")
</pallas_src>

<mosaic_0001>
module attributes {stable_mosaic.version = 11 : i64} {
  func.func @_copy_kernel(%arg0: i32, %arg1: memref<1x2048xf32, #tpu.memory_space<vmem>>, %arg2: memref<1x2048xf32, #tpu.memory_space<vmem>>) attributes {dimension_semantics = [#tpu.dimension_semantics<parallel>], iteration_bounds = array<i64: 1>, scalar_prefetch = 0 : i64, scratch_operands = 0 : i64, tpu.core_type = #tpu.core_type<tc>, window_params = [{transform_indices = @transform_0, window_bounds = array<i64: 1, 2048>}, {transform_indices = @transform_1, window_bounds = array<i64: 1, 2048>}]} {
    %c0 = arith.constant 0 : index
    %c0_0 = arith.constant 0 : index
    %0 = vector.load %arg1[%c0, %c0_0] : memref<1x2048xf32, #tpu.memory_space<vmem>>, vector<1x2048xf32>
    %c0_1 = arith.constant 0 : index
    %c0_2 = arith.constant 0 : index
    %1 = vector.load %arg2[%c0_1, %c0_2] : memref<1x2048xf32, #tpu.memory_space<vmem>>, vector<1x2048xf32>
    tpu.vector_store %arg2[%c0_1, %c0_2], %0 {strides = array<i32>} : memref<1x2048xf32, #tpu.memory_space<vmem>>, vector<1x2048xf32>,
    return
  }
  func.func @transform_0(%arg0: i32) -> (i32, i32) {
    %c0_i32 = arith.constant 0 : i32
    %c0_i32_0 = arith.constant 0 : i32
    return %arg0, %c0_i32 : i32, i32
  }
  func.func @transform_1(%arg0: i32) -> (i32, i32) {
    %c0_i32 = arith.constant 0 : i32
    %c0_i32_0 = arith.constant 0 : i32
    return %arg0, %c0_i32 : i32, i32
  }
}

</mosaic_0001>

<llo_original>
// kernel: tpu_custom_call.1
$region0: #{tpu_custom_call.1}
  #allocation0 [shape = 'u32[]', space=smem, size = 0x4, offset = 0x4, fixed_abs, tag = 'smem constant byte address 0x4 - core index']
  #allocation1 [shape = 'u32[144,128]{1,0:T(1,128)}', space=vmem, size = 0x12000, scoped, tag = 'internal scratch']
  %s0 = inlined_call_operand.hbm [shape: f32[1,2048], index: 0, kind: input, shape index: {}, may-alias: {0,1}]
  %s1 = inlined_call_operand.hbm [shape: f32[1,2048], index: 1, kind: output, shape index: {}, may-alias: {0,1}]
  %s2 = sld [smem:[#allocation0]]
  $region18: #{tpu_custom_call.1} parent=0
    _
  %s4 = ssub.s32 1, %s2
  %s5 = scalar_select 0, %s4, %s2
  $region1: #{tpu_custom_call.1} parent=0
    #allocation2 [shape = 'u8[8192]{0}', space=vmem, size = 0x2000, scoped, tag = 'input window, operand 0, single buffered']
    #allocation3 [shape = 's32[1]{0}', space=sflag, size = 0x4, scoped, tag = 'scoped memory for tpu_custom_call.1']
    #allocation4 [shape = 's32[1]{0}', space=sflag, size = 0x4, scoped, tag = 'scoped memory for tpu_custom_call.1']
    #allocation5 [shape = 'u8[8192]{0}', space=vmem, size = 0x2000, scoped, tag = 'output window, operand 0, single buffered']
    %6 = vsyncpa [#allocation3], 0
    %7 = vsyncpa [#allocation4], 0
    // Predicated region
    $region2: #{tpu_custom_call.1} parent=1 // pred_check
      _
    $region3: #{tpu_custom_call.1} parent=1 // pred_check_branch
      %9 = sbr.rel (0) target = $region5
    $region4: #{tpu_custom_call.1} parent=1 // pred_region
      %s11 = ssub.s32 256, 256
      %12 = vsyncadd [#allocation3], %s11
      %s14 = sshll.u32 [#allocation2], 4
      %s15 = int_to_ptr.vmem [resolvable:$true] %s14
      %17 = dma.hbm_to_vmem [thread:$0]  %s0, 256, %s15, [#allocation3]
    $region5: #{tpu_custom_call.1} parent=1 // pred_fallthru
      _
    // Predicated region
    $region6: #{tpu_custom_call.1} parent=1 // pred_check
      _
    $region7: #{tpu_custom_call.1} parent=1 // pred_check_branch
      %19 = sbr.rel (0) target = $region9
    $region8: #{tpu_custom_call.1} parent=1 // pred_region
      %20 = dma.done [#allocation3], 256
    $region9: #{tpu_custom_call.1} parent=1 // pred_fallthru
      _
    %v21 = vld [vmem:[#allocation2] sm:$0xff]
    %v22 = vld [vmem:[#allocation2 + $0x8] sm:$0xff]
    %23 = vst [vmem:[#allocation5] sm:$0xff] %v21
    %24 = vst [vmem:[#allocation5 + $0x8] sm:$0xff] %v22
    // Predicated region
    $region10: #{tpu_custom_call.1} parent=1 // pred_check
      _
    $region11: #{tpu_custom_call.1} parent=1 // pred_check_branch
      %26 = sbr.rel (0) target = $region13
    $region12: #{tpu_custom_call.1} parent=1 // pred_region
      %s28 = ssub.s32 256, 256
      %29 = vsyncadd [#allocation4], %s28
      %s31 = sshll.u32 [#allocation5], 4
      %s32 = int_to_ptr.vmem [resolvable:$true] %s31
      %34 = dma.vmem_to_hbm [thread:$0]  %s32, 256, %s1, [#allocation4]
    $region13: #{tpu_custom_call.1} parent=1 // pred_fallthru
      _
    // Predicated region
    $region14: #{tpu_custom_call.1} parent=1 // pred_check
      _
    $region15: #{tpu_custom_call.1} parent=1 // pred_check_branch
      %36 = sbr.rel (0) target = $region17
    $region16: #{tpu_custom_call.1} parent=1 // pred_region
      %37 = dma.done [#allocation4], 256
    $region17: #{tpu_custom_call.1} parent=1 // pred_fallthru
      _
    %38 = vsyncpa [#allocation3], 1
    %39 = vsyncpa [#allocation4], 1

</llo_original>
